<compile_context>
chip_gen: v7x
topology: tpu7x:2x2x1
jax: 0.10.0
libtpu: 0.0.40
codegen_flags: <defaults>
</compile_context>

<pallas_src>
import functools

import jax
import jax.numpy as jnp
from jax.experimental import pallas as pl
from jax.experimental.pallas import tpu as pltpu

_LANE = 128     # vreg lane width
_SUBLANE = 8    # f32 sublane count


def _round_up(x, m):
    return ((x + m - 1) // m) * m


def _mlp_fused_kernel(x_ref, *refs, num_layers):
    """Fused MLP on one (tile_m, K0) row-tile.

    refs = (w0, b0, w1, b1, ..., w_{L-1}, b_{L-1}, out).
    Weights are bf16 (K_i, N_i); biases are f32 (1, N_i).  Intermediates stay
    VMEM/vreg-resident; only the final layer writes out.
    """
    o_ref = refs[-1]
    wb_refs = refs[:-1]
    h = x_ref[...]                                     # f32 (tile_m, K0)
    for i in range(num_layers):
        w = wb_refs[2 * i][...]                        # bf16 (K_i, N_i), pre-transposed
        b = wb_refs[2 * i + 1][...]                    # f32  (1,   N_i)
        # bf16 MXU operands, f32 accumulation; keep VPU work (bias-add/ReLU) in f32.
        h = jnp.dot(h.astype(jnp.bfloat16), w,
                    preferred_element_type=jnp.float32) + b
        if i < num_layers - 1:
            h = jnp.maximum(h, 0.0)
    o_ref[...] = h.astype(o_ref.dtype)


def init_mlp_params(key, input_dim, hidden_dim, output_dim, num_layers):
    """Deterministic init mirroring nn.Linear default (uniform +/- 1/sqrt(fan_in)).

    Returns PyTorch-layout params: list of (W (out,in), b (out,)), all f32.
    """
    h = [hidden_dim] * (num_layers - 1)
    dims_in = [input_dim] + h
    dims_out = h + [output_dim]
    params = []
    for n_in, n_out in zip(dims_in, dims_out):
        key, kw, kb = jax.random.split(key, 3)
        bound = 1.0 / jnp.sqrt(jnp.float32(n_in))
        w = jax.random.uniform(kw, (n_out, n_in), jnp.float32, -bound, bound)
        b = jax.random.uniform(kb, (n_out,), jnp.float32, -bound, bound)
        params.append((w, b))
    return params


def prepare_mlp_params(params):
    """One-time (load-time) prep: transpose to (K, N), pad, store weights in bf16.

    * Intermediate layers: N padded only to a multiple of 8 (sublane-friendly) —
      they never touch HBM, so lane-padding them would just inflate the next
      layer's contraction K and weight-DMA bytes.
    * Final layer: N padded to a multiple of 128 for an unmasked lane-dense store.
    * Padded weight rows/cols and bias cols are exactly zero, so they contribute
      nothing (exact in bf16 as well).
    Biases stay f32 (bias-add runs on the VPU in f32).
    """
    prepped = []
    k_prev = params[0][0].shape[1]            # input_dim (un-padded)
    num_layers = len(params)
    for idx, (w, b) in enumerate(params):
        n_out, n_in = w.shape
        last = idx == num_layers - 1
        n_pad = _round_up(n_out, _LANE if last else _SUBLANE)
        w_t = (jnp.zeros((k_prev, n_pad), jnp.float32)
               .at[:n_in, :n_out].set(jnp.asarray(w, jnp.float32).T)
               .astype(jnp.bfloat16))
        b_p = (jnp.zeros((1, n_pad), jnp.float32)
               .at[0, :n_out].set(jnp.asarray(b, jnp.float32)))
        prepped.append((w_t, b_p))
        k_prev = n_pad
    return prepped


def _tile_m_cap():
    """Generation-aware tile_m cap (v6e: 128 MiB VMEM -> 1024; v5e/v7x: 512)."""
    try:
        kind = jax.devices()[0].device_kind.lower()
    except Exception:
        return 512
    if "v6" in kind:
        return 1024
    return 512


def _choose_tile_m(m):
    """Pick (tile_m, m_pad): 8-aligned, waste-bounded, >=2 grid steps when large."""
    m8 = _round_up(max(m, _SUBLANE), _SUBLANE)
    if m8 <= 256:
        return m8, m8                       # single grid step; tiny / head case
    cap = _tile_m_cap()
    half = _round_up(m8 // 2, _SUBLANE)     # guarantee >= 2 grid steps (v7x: 2 TCs)
    for cand in (cap, cap // 2, cap // 4, 128):
        tile = _round_up(max(_SUBLANE, min(cand, half)), _SUBLANE)
        m_pad = _round_up(m8, tile)
        if (m_pad - m) * 8 <= m:            # padding waste <= 12.5%
            return tile, m_pad
    tile = 128 if half >= 128 else half
    return tile, _round_up(m8, tile)


def mlp_forward(x, prepped_params, out_dim):
    """Reproduces MLP.forward: ReLU after every layer except the last."""
    num_layers = len(prepped_params)
    lead_shape = x.shape[:-1]
    k0 = x.shape[-1]
    m = 1
    for d in lead_shape:
        m *= d
    h = x.reshape(m, k0).astype(jnp.float32)

    tile_m, m_pad = _choose_tile_m(m)
    if m_pad != m:
        h = jnp.pad(h, ((0, m_pad - m), (0, 0)))

    n_last_pad = prepped_params[-1][0].shape[1]
    max_n = max(w.shape[1] for w, _ in prepped_params)

    flat_wb = []
    for w_t, b_p in prepped_params:
        flat_wb.append(w_t)
        flat_wb.append(b_p)

    # Cost estimate (advisory) and an explicit VMEM budget.
    flops = 0
    bytes_accessed = h.size * 4 + m_pad * n_last_pad * 4
    resident_wb = 0
    for w_t, b_p in prepped_params:
        flops += 2 * m_pad * w_t.shape[0] * w_t.shape[1]
        bytes_accessed += w_t.size * w_t.dtype.itemsize + b_p.size * b_p.dtype.itemsize
        resident_wb += w_t.size * w_t.dtype.itemsize + b_p.size * b_p.dtype.itemsize
    act_io = 2 * tile_m * k0 * 4 + 2 * tile_m * n_last_pad * 4   # double-buffered in/out tiles
    scratch = 2 * tile_m * max_n * 4                              # intermediate activations
    vmem_limit = int(min(96 << 20,
                         max(32 << 20, 2 * resident_wb + act_io + scratch + (8 << 20))))

    kernel = functools.partial(_mlp_fused_kernel, num_layers=num_layers)

    def call(weight_pipeline_mode):
        in_specs = [pl.BlockSpec((tile_m, k0), lambda i: (i, 0))]   # row-tiled activations
        for w_t, b_p in prepped_params:
            if weight_pipeline_mode is None:
                in_specs.append(pl.BlockSpec(w_t.shape, lambda i: (0, 0)))
                in_specs.append(pl.BlockSpec(b_p.shape, lambda i: (0, 0)))
            else:
                in_specs.append(pl.BlockSpec(w_t.shape, lambda i: (0, 0),
                                             pipeline_mode=weight_pipeline_mode))
                in_specs.append(pl.BlockSpec(b_p.shape, lambda i: (0, 0),
                                             pipeline_mode=weight_pipeline_mode))
        out = pl.pallas_call(
            kernel,
            out_shape=jax.ShapeDtypeStruct((m_pad, n_last_pad), jnp.float32),
            grid=(m_pad // tile_m,),
            in_specs=in_specs,
            out_specs=pl.BlockSpec((tile_m, n_last_pad), lambda i: (i, 0)),
            compiler_params=pltpu.CompilerParams(
                dimension_semantics=("parallel",),
                vmem_limit_bytes=vmem_limit),
            cost_estimate=pl.CostEstimate(
                flops=flops, transcendentals=0, bytes_accessed=bytes_accessed),
        )(h, *flat_wb)
        return jax.block_until_ready(out)

    try:
        # Weights/biases have constant index maps -> single-buffer them (halves their
        # resident VMEM; double-buffering a grid-invariant block buys nothing).
        out = call(pl.Buffered(1))
    except Exception:
        # Fallback for jax versions that reject single-buffered pipeline_mode.
        out = call(None)

    # Slice off the M / lane padding and restore leading dims.
    return out[:m, :out_dim].reshape(*lead_shape, out_dim)


def mlp_forward_ref(x, params, mxu_dtype=jnp.float32):
    """Pure-JAX reference (PyTorch-layout params).

    mxu_dtype=jnp.bfloat16 mirrors the kernel's math exactly (bf16 MXU operands,
    f32 accumulation, f32 bias-add/ReLU); jnp.float32 gives the exact-f32 baseline.
    """
    num_layers = len(params)
    h = x.astype(jnp.float32)
    for i, (w, b) in enumerate(params):
        w_t = jnp.asarray(w, jnp.float32).T.astype(mxu_dtype)
        h = jnp.dot(h.astype(mxu_dtype), w_t,
                    preferred_element_type=jnp.float32) + jnp.asarray(b, jnp.float32)
        if i < num_layers - 1:
            h = jnp.maximum(h, 0.0)
    return h


# TODO(synk): fp8 weight storage on v7x (MXU fp8 path) would halve weight DMA again
# vs bf16 at small M; kept bf16 here as the precision-safe default for all chips.

if __name__ == "__main__":
    key = jax.random.PRNGKey(0)
    k_x, k_x2, k_p = jax.random.split(key, 3)

    # Small shapes consistent with the module: (batch, seq, input_dim).
    batch, seq = 2, 8
    input_dim, hidden_dim, output_dim, num_layers = 32, 64, 16, 3

    params = init_mlp_params(k_p, input_dim, hidden_dim, output_dim, num_layers)
    prepped = prepare_mlp_params(params)   # one-time, off the forward critical path

    # --- Case 1: tiny diffusion-head case (M = 16, single grid step) ---
    x = jax.random.normal(k_x, (batch, seq, input_dim), dtype=jnp.float32)
    out = jax.block_until_ready(mlp_forward(x, prepped, output_dim))
    assert out.shape == (batch, seq, output_dim), out.shape
    ref_bf16 = mlp_forward_ref(x, params, jnp.bfloat16)   # matches kernel math
    ref_f32 = mlp_forward_ref(x, params, jnp.float32)     # exact-f32 semantics check
    assert jnp.allclose(out, ref_bf16, atol=1e-4, rtol=1e-4), "mismatch vs bf16 reference"
    assert jnp.allclose(out, ref_f32, atol=5e-2, rtol=5e-2), "mismatch vs f32 reference"

    # --- Case 2: larger M to exercise the multi-step grid + M-padding path ---
    batch2, seq2 = 5, 120                                  # M = 600 -> >= 2 grid steps
    x2 = jax.random.normal(k_x2, (batch2, seq2, input_dim), dtype=jnp.float32)
    out2 = jax.block_until_ready(mlp_forward(x2, prepped, output_dim))
    assert out2.shape == (batch2, seq2, output_dim), out2.shape
    ref2 = mlp_forward_ref(x2, params, jnp.bfloat16)
    assert jnp.allclose(out2, ref2, atol=1e-4, rtol=1e-4), "mismatch vs bf16 reference (large M)"

    print("KERNEL_OK")
</pallas_src>

<mosaic_0001>
module attributes {stable_mosaic.version = 11 : i64} {
  func.func @_mlp_fused_kernel(%arg0: i32, %arg1: memref<16x32xf32, #tpu.memory_space<vmem>>, %arg2: memref<32x64xbf16, #tpu.memory_space<vmem>>, %arg3: memref<1x64xf32, #tpu.memory_space<vmem>>, %arg4: memref<64x64xbf16, #tpu.memory_space<vmem>>, %arg5: memref<1x64xf32, #tpu.memory_space<vmem>>, %arg6: memref<64x128xbf16, #tpu.memory_space<vmem>>, %arg7: memref<1x128xf32, #tpu.memory_space<vmem>>, %arg8: memref<16x128xf32, #tpu.memory_space<vmem>>) attributes {dimension_semantics = [#tpu.dimension_semantics<parallel>], iteration_bounds = array<i64: 1>, scalar_prefetch = 0 : i64, scratch_operands = 0 : i64, tpu.core_type = #tpu.core_type<tc>, window_params = [{transform_indices = @transform_0, window_bounds = array<i64: 16, 32>}, {pipeline_mode = #tpu.pipeline_mode<synchronous>, transform_indices = @transform_1, window_bounds = array<i64: 32, 64>}, {pipeline_mode = #tpu.pipeline_mode<synchronous>, transform_indices = @transform_2, window_bounds = array<i64: 1, 64>}, {pipeline_mode = #tpu.pipeline_mode<synchronous>, transform_indices = @transform_3, window_bounds = array<i64: 64, 64>}, {pipeline_mode = #tpu.pipeline_mode<synchronous>, transform_indices = @transform_4, window_bounds = array<i64: 1, 64>}, {pipeline_mode = #tpu.pipeline_mode<synchronous>, transform_indices = @transform_5, window_bounds = array<i64: 64, 128>}, {pipeline_mode = #tpu.pipeline_mode<synchronous>, transform_indices = @transform_6, window_bounds = array<i64: 1, 128>}, {transform_indices = @transform_7, window_bounds = array<i64: 16, 128>}]} {
    %c0 = arith.constant 0 : index
    %c0_0 = arith.constant 0 : index
    %0 = vector.load %arg1[%c0, %c0_0] : memref<16x32xf32, #tpu.memory_space<vmem>>, vector<16x32xf32>
    %c0_1 = arith.constant 0 : index
    %c0_2 = arith.constant 0 : index
    %1 = vector.load %arg2[%c0_1, %c0_2] : memref<32x64xbf16, #tpu.memory_space<vmem>>, vector<32x64xbf16>
    %c0_3 = arith.constant 0 : index
    %c0_4 = arith.constant 0 : index
    %2 = vector.load %arg3[%c0_3, %c0_4] : memref<1x64xf32, #tpu.memory_space<vmem>>, vector<1x64xf32>
    %3 = arith.truncf %0 : vector<16x32xf32> to vector<16x32xbf16>
    %cst = arith.constant dense<0.000000e+00> : vector<16x64xf32>
    %4 = tpu.matmul %3, %1, %cst {dimension_numbers = #tpu.dot_dimension_numbers<[1], [0], [0], [1], [0, 0, 1, 1], [], []>} : vector<16x32xbf16>, vector<32x64xbf16>, vector<16x64xf32> -> vector<16x64xf32>
    %5 = vector.broadcast %2 : vector<1x64xf32> to vector<16x64xf32>
    %6 = arith.addf %4, %5 : vector<16x64xf32>
    %cst_5 = arith.constant 0.000000e+00 : f32
    %7 = vector.broadcast %cst_5 : f32 to vector<16x64xf32>
    %8 = arith.maximumf %6, %7 : vector<16x64xf32>
    %c0_6 = arith.constant 0 : index
    %c0_7 = arith.constant 0 : index
    %9 = vector.load %arg4[%c0_6, %c0_7] : memref<64x64xbf16, #tpu.memory_space<vmem>>, vector<64x64xbf16>
    %c0_8 = arith.constant 0 : index
    %c0_9 = arith.constant 0 : index
    %10 = vector.load %arg5[%c0_8, %c0_9] : memref<1x64xf32, #tpu.memory_space<vmem>>, vector<1x64xf32>
    %11 = arith.truncf %8 : vector<16x64xf32> to vector<16x64xbf16>
    %cst_10 = arith.constant dense<0.000000e+00> : vector<16x64xf32>
    %12 = tpu.matmul %11, %9, %cst_10 {dimension_numbers = #tpu.dot_dimension_numbers<[1], [0], [0], [1], [0, 0, 1, 1], [], []>} : vector<16x64xbf16>, vector<64x64xbf16>, vector<16x64xf32> -> vector<16x64xf32>
    %13 = vector.broadcast %10 : vector<1x64xf32> to vector<16x64xf32>
    %14 = arith.addf %12, %13 : vector<16x64xf32>
    %cst_11 = arith.constant 0.000000e+00 : f32
    %15 = vector.broadcast %cst_11 : f32 to vector<16x64xf32>
    %16 = arith.maximumf %14, %15 : vector<16x64xf32>
    %c0_12 = arith.constant 0 : index
    %c0_13 = arith.constant 0 : index
    %17 = vector.load %arg6[%c0_12, %c0_13] : memref<64x128xbf16, #tpu.memory_space<vmem>>, vector<64x128xbf16>
    %c0_14 = arith.constant 0 : index
    %c0_15 = arith.constant 0 : index
    %18 = vector.load %arg7[%c0_14, %c0_15] : memref<1x128xf32, #tpu.memory_space<vmem>>, vector<1x128xf32>
    %19 = arith.truncf %16 : vector<16x64xf32> to vector<16x64xbf16>
    %cst_16 = arith.constant dense<0.000000e+00> : vector<16x128xf32>
    %20 = tpu.matmul %19, %17, %cst_16 {dimension_numbers = #tpu.dot_dimension_numbers<[1], [0], [0], [1], [0, 0, 1, 1], [], []>} : vector<16x64xbf16>, vector<64x128xbf16>, vector<16x128xf32> -> vector<16x128xf32>
    %21 = vector.broadcast %18 : vector<1x128xf32> to vector<16x128xf32>
    %22 = arith.addf %20, %21 : vector<16x128xf32>
    %c0_17 = arith.constant 0 : index
    %c0_18 = arith.constant 0 : index
    %23 = vector.load %arg8[%c0_17, %c0_18] : memref<16x128xf32, #tpu.memory_space<vmem>>, vector<16x128xf32>
    tpu.vector_store %arg8[%c0_17, %c0_18], %22 {strides = array<i32>} : memref<16x128xf32, #tpu.memory_space<vmem>>, vector<16x128xf32>,
    return
  }
  func.func @transform_0(%arg0: i32) -> (i32, i32) {
    %c0_i32 = arith.constant 0 : i32
    %c0_i32_0 = arith.constant 0 : i32
    return %arg0, %c0_i32 : i32, i32
  }
  func.func @transform_1(%arg0: i32) -> (i32, i32) {
    %c0_i32 = arith.constant 0 : i32
    %c0_i32_0 = arith.constant 0 : i32
    %c0_i32_1 = arith.constant 0 : i32
    return %c0_i32, %c0_i32_0 : i32, i32
  }
  func.func @transform_2(%arg0: i32) -> (i32, i32) {
    %c0_i32 = arith.constant 0 : i32
    %c0_i32_0 = arith.constant 0 : i32
    %c0_i32_1 = arith.constant 0 : i32
    return %c0_i32, %c0_i32_0 : i32, i32
  }
  func.func @transform_3(%arg0: i32) -> (i32, i32) {
    %c0_i32 = arith.constant 0 : i32
    %c0_i32_0 = arith.constant 0 : i32
    %c0_i32_1 = arith.constant 0 : i32
    return %c0_i32, %c0_i32_0 : i32, i32
  }
  func.func @transform_4(%arg0: i32) -> (i32, i32) {
    %c0_i32 = arith.constant 0 : i32
    %c0_i32_0 = arith.constant 0 : i32
    %c0_i32_1 = arith.constant 0 : i32
    return %c0_i32, %c0_i32_0 : i32, i32
  }
  func.func @transform_5(%arg0: i32) -> (i32, i32) {
    %c0_i32 = arith.constant 0 : i32
    %c0_i32_0 = arith.constant 0 : i32
    %c0_i32_1 = arith.constant 0 : i32
    return %c0_i32, %c0_i32_0 : i32, i32
  }
  func.func @transform_6(%arg0: i32) -> (i32, i32) {
    %c0_i32 = arith.constant 0 : i32
    %c0_i32_0 = arith.constant 0 : i32
    %c0_i32_1 = arith.constant 0 : i32
    return %c0_i32, %c0_i32_0 : i32, i32
  }
  func.func @transform_7(%arg0: i32) -> (i32, i32) {
    %c0_i32 = arith.constant 0 : i32
    %c0_i32_0 = arith.constant 0 : i32
    return %arg0, %c0_i32 : i32, i32
  }
}

module attributes {stable_mosaic.version = 11 : i64} {
  func.func @_mlp_fused_kernel(%arg0: i32, %arg1: memref<16x32xf32, #tpu.memory_space<vmem>>, %arg2: memref<32x64xbf16, #tpu.memory_space<vmem>>, %arg3: memref<1x64xf32, #tpu.memory_space<vmem>>, %arg4: memref<64x64xbf16, #tpu.memory_space<vmem>>, %arg5: memref<1x64xf32, #tpu.memory_space<vmem>>, %arg6: memref<64x128xbf16, #tpu.memory_space<vmem>>, %arg7: memref<1x128xf32, #tpu.memory_space<vmem>>, %arg8: memref<16x128xf32, #tpu.memory_space<vmem>>) attributes {dimension_semantics = [#tpu.dimension_semantics<parallel>], iteration_bounds = array<i64: 1>, scalar_prefetch = 0 : i64, scratch_operands = 0 : i64, tpu.core_type = #tpu.core_type<tc>, window_params = [{transform_indices = @transform_0, window_bounds = array<i64: 16, 32>}, {pipeline_mode = #tpu.pipeline_mode<synchronous>, transform_indices = @transform_1, window_bounds = array<i64: 32, 64>}, {pipeline_mode = #tpu.pipeline_mode<synchronous>, transform_indices = @transform_2, window_bounds = array<i64: 1, 64>}, {pipeline_mode = #tpu.pipeline_mode<synchronous>, transform_indices = @transform_3, window_bounds = array<i64: 64, 64>}, {pipeline_mode = #tpu.pipeline_mode<synchronous>, transform_indices = @transform_4, window_bounds = array<i64: 1, 64>}, {pipeline_mode = #tpu.pipeline_mode<synchronous>, transform_indices = @transform_5, window_bounds = array<i64: 64, 128>}, {pipeline_mode = #tpu.pipeline_mode<synchronous>, transform_indices = @transform_6, window_bounds = array<i64: 1, 128>}, {transform_indices = @transform_7, window_bounds = array<i64: 16, 128>}]} {
    %c0 = arith.constant 0 : index
    %c0_0 = arith.constant 0 : index
    %0 = vector.load %arg1[%c0, %c0_0] : memref<16x32xf32, #tpu.memory_space<vmem>>, vector<16x32xf32>
    %c0_1 = arith.constant 0 : index
    %c0_2 = arith.constant 0 : index
    %1 = vector.load %arg2[%c0_1, %c0_2] : memref<32x64xbf16, #tpu.memory_space<vmem>>, vector<32x64xbf16>
    %c0_3 = arith.constant 0 : index
    %c0_4 = arith.constant 0 : index
    %2 = vector.load %arg3[%c0_3, %c0_4] : memref<1x64xf32, #tpu.memory_space<vmem>>, vector<1x64xf32>
    %3 = arith.truncf %0 : vector<16x32xf32> to vector<16x32xbf16>
    %cst = arith.constant dense<0.000000e+00> : vector<16x64xf32>
    %4 = tpu.matmul %3, %1, %cst {dimension_numbers = #tpu.dot_dimension_numbers<[1], [0], [0], [1], [0, 0, 1, 1], [], []>} : vector<16x32xbf16>, vector<32x64xbf16>, vector<16x64xf32> -> vector<16x64xf32>
    %5 = vector.broadcast %2 : vector<1x64xf32> to vector<16x64xf32>
    %6 = arith.addf %4, %5 : vector<16x64xf32>
    %cst_5 = arith.constant 0.000000e+00 : f32
    %7 = vector.broadcast %cst_5 : f32 to vector<16x64xf32>
    %8 = arith.maximumf %6, %7 : vector<16x64xf32>
    %c0_6 = arith.constant 0 : index
    %c0_7 = arith.constant 0 : index
    %9 = vector.load %arg4[%c0_6, %c0_7] : memref<64x64xbf16, #tpu.memory_space<vmem>>, vector<64x64xbf16>
    %c0_8 = arith.constant 0 : index
    %c0_9 = arith.constant 0 : index
    %10 = vector.load %arg5[%c0_8, %c0_9] : memref<1x64xf32, #tpu.memory_space<vmem>>, vector<1x64xf32>
    %11 = arith.truncf %8 : vector<16x64xf32> to vector<16x64xbf16>
    %cst_10 = arith.constant dense<0.000000e+00> : vector<16x64xf32>
    %12 = tpu.matmul %11, %9, %cst_10 {dimension_numbers = #tpu.dot_dimension_numbers<[1], [0], [0], [1], [0, 0, 1, 1], [], []>} : vector<16x64xbf16>, vector<64x64xbf16>, vector<16x64xf32> -> vector<16x64xf32>
    %13 = vector.broadcast %10 : vector<1x64xf32> to vector<16x64xf32>
    %14 = arith.addf %12, %13 : vector<16x64xf32>
    %cst_11 = arith.constant 0.000000e+00 : f32
    %15 = vector.broadcast %cst_11 : f32 to vector<16x64xf32>
    %16 = arith.maximumf %14, %15 : vector<16x64xf32>
    %c0_12 = arith.constant 0 : index
    %c0_13 = arith.constant 0 : index
    %17 = vector.load %arg6[%c0_12, %c0_13] : memref<64x128xbf16, #tpu.memory_space<vmem>>, vector<64x128xbf16>
    %c0_14 = arith.constant 0 : index
    %c0_15 = arith.constant 0 : index
    %18 = vector.load %arg7[%c0_14, %c0_15] : memref<1x128xf32, #tpu.memory_space<vmem>>, vector<1x128xf32>
    %19 = arith.truncf %16 : vector<16x64xf32> to vector<16x64xbf16>
    %cst_16 = arith.constant dense<0.000000e+00> : vector<16x128xf32>
    %20 = tpu.matmul %19, %17, %cst_16 {dimension_numbers = #tpu.dot_dimension_numbers<[1], [0], [0], [1], [0, 0, 1, 1], [], []>} : vector<16x64xbf16>, vector<64x128xbf16>, vector<16x128xf32> -> vector<16x128xf32>
    %21 = vector.broadcast %18 : vector<1x128xf32> to vector<16x128xf32>
    %22 = arith.addf %20, %21 : vector<16x128xf32>
    %c0_17 = arith.constant 0 : index
    %c0_18 = arith.constant 0 : index
    %23 = vector.load %arg8[%c0_17, %c0_18] : memref<16x128xf32, #tpu.memory_space<vmem>>, vector<16x128xf32>
    tpu.vector_store %arg8[%c0_17, %c0_18], %22 {strides = array<i32>} : memref<16x128xf32, #tpu.memory_space<vmem>>, vector<16x128xf32>,
    return
  }
  func.func @transform_0(%arg0: i32) -> (i32, i32) {
    %c0_i32 = arith.constant 0 : i32
    %c0_i32_0 = arith.constant 0 : i32
    return %arg0, %c0_i32 : i32, i32
  }
  func.func @transform_1(%arg0: i32) -> (i32, i32) {
    %c0_i32 = arith.constant 0 : i32
    %c0_i32_0 = arith.constant 0 : i32
    %c0_i32_1 = arith.constant 0 : i32
    return %c0_i32, %c0_i32_0 : i32, i32
  }
  func.func @transform_2(%arg0: i32) -> (i32, i32) {
    %c0_i32 = arith.constant 0 : i32
    %c0_i32_0 = arith.constant 0 : i32
    %c0_i32_1 = arith.constant 0 : i32
    return %c0_i32, %c0_i32_0 : i32, i32
  }
  func.func @transform_3(%arg0: i32) -> (i32, i32) {
    %c0_i32 = arith.constant 0 : i32
    %c0_i32_0 = arith.constant 0 : i32
    %c0_i32_1 = arith.constant 0 : i32
    return %c0_i32, %c0_i32_0 : i32, i32
  }
  func.func @transform_4(%arg0: i32) -> (i32, i32) {
    %c0_i32 = arith.constant 0 : i32
    %c0_i32_0 = arith.constant 0 : i32
    %c0_i32_1 = arith.constant 0 : i32
    return %c0_i32, %c0_i32_0 : i32, i32
  }
  func.func @transform_5(%arg0: i32) -> (i32, i32) {
    %c0_i32 = arith.constant 0 : i32
    %c0_i32_0 = arith.constant 0 : i32
    %c0_i32_1 = arith.constant 0 : i32
    return %c0_i32, %c0_i32_0 : i32, i32
  }
  func.func @transform_6(%arg0: i32) -> (i32, i32) {
    %c0_i32 = arith.constant 0 : i32
    %c0_i32_0 = arith.constant 0 : i32
    %c0_i32_1 = arith.constant 0 : i32
    return %c0_i32, %c0_i32_0 : i32, i32
  }
  func.func @transform_7(%arg0: i32) -> (i32, i32) {
    %c0_i32 = arith.constant 0 : i32
    %c0_i32_0 = arith.constant 0 : i32
    return %arg0, %c0_i32 : i32, i32
  }
}

</mosaic_0001>

<llo_original>
// kernel: tpu_custom_call.1
$region0: #{tpu_custom_call.1}
  #allocation0 [shape = 'u32[]', space=smem, size = 0x4, offset = 0x4, fixed_abs, tag = 'smem constant byte address 0x4 - core index']
  #allocation1 [shape = 'u32[144,128]{1,0:T(1,128)}', space=vmem, size = 0x12000, scoped, tag = 'internal scratch']
  %s0 = inlined_call_operand.hbm [shape: f32[16,32], index: 0, kind: input, shape index: {}]
  %s1 = inlined_call_operand.hbm [shape: bf16[32,64], index: 1, kind: input, shape index: {}]
  %s2 = inlined_call_operand.vmem [shape: f32[1,64], index: 2, kind: input, shape index: {}]
  %s3 = inlined_call_operand.hbm [shape: bf16[64,64], index: 3, kind: input, shape index: {}]
  %s4 = inlined_call_operand.vmem [shape: f32[1,64], index: 4, kind: input, shape index: {}]
  %s5 = inlined_call_operand.hbm [shape: bf16[64,128], index: 5, kind: input, shape index: {}]
  %s6 = inlined_call_operand.vmem [shape: f32[1,128], index: 6, kind: input, shape index: {}]
  %s7 = inlined_call_operand.hbm [shape: f32[16,128], index: 7, kind: output, shape index: {}]
  %s8 = sld [smem:[#allocation0]]
  $region54: #{tpu_custom_call.1} parent=0
    _
  %s10 = ssub.s32 1, %s8
  %s11 = scalar_select 0, %s10, %s8
  $region1: #{tpu_custom_call.1} parent=0
    #allocation2 [shape = 'u8[8192]{0}', space=vmem, size = 0x2000, scoped, tag = 'input window, operand 0, single buffered']
    #allocation3 [shape = 's32[1]{0}', space=sflag, size = 0x4, scoped, tag = 'scoped memory for tpu_custom_call.1']
    #allocation4 [shape = 's32[1]{0}', space=sflag, size = 0x4, scoped, tag = 'scoped memory for tpu_custom_call.1']
    #allocation5 [shape = 'u8[8192]{0}', space=vmem, size = 0x2000, scoped, tag = 'input window, operand 1, single buffered']
    #allocation6 [shape = 's32[1]{0}', space=sflag, size = 0x4, scoped, tag = 'scoped memory for tpu_custom_call.1']
    #allocation7 [shape = 'u8[16384]{0}', space=vmem, size = 0x4000, scoped, tag = 'input window, operand 3, single buffered']
    #allocation8 [shape = 'u8[16384]{0}', space=vmem, size = 0x4000, scoped, tag = 'input window, operand 5, single buffered']
    #allocation9 [shape = 's32[1]{0}', space=sflag, size = 0x4, scoped, tag = 'scoped memory for tpu_custom_call.1']
    #allocation10 [shape = 'u8[8192]{0}', space=vmem, size = 0x2000, scoped, tag = 'output window, operand 0, single buffered']
    %12 = vsyncpa [#allocation3], 0
    %13 = vsyncpa [#allocation6], 0
    %14 = vsyncpa [#allocation9], 0
    %15 = vsyncpa [#allocation4], 0
    // Predicated region
    $region2: #{tpu_custom_call.1} parent=1 // pred_check
      _
    $region3: #{tpu_custom_call.1} parent=1 // pred_check_branch
      %17 = sbr.rel (0) target = $region5
    $region4: #{tpu_custom_call.1} parent=1 // pred_region
      %s19 = ssub.s32 256, 256
      %20 = vsyncadd [#allocation3], %s19
      %s21 = sshll.u32 [#allocation2], 4
      %s22 = int_to_ptr.vmem [resolvable:$true] %s21
      %27 = dma.hbm_to_vmem [thread:$0]  %s0, 256, %s22, [#allocation3], 128, 128, 8
    $region5: #{tpu_custom_call.1} parent=1 // pred_fallthru
      _
    // Predicated region
    $region6: #{tpu_custom_call.1} parent=1 // pred_check
      _
    $region7: #{tpu_custom_call.1} parent=1 // pred_check_branch
      %29 = sbr.rel (0) target = $region9
    $region8: #{tpu_custom_call.1} parent=1 // pred_region
      %s31 = ssub.s32 256, 256
      %32 = vsyncadd [#allocation6], %s31
      %s33 = sshll.u32 [#allocation5], 4
      %s34 = int_to_ptr.vmem [resolvable:$true] %s33
      %39 = dma.hbm_to_vmem [thread:$0]  %s1, 256, %s34, [#allocation6], 64, 64, 4
    $region9: #{tpu_custom_call.1} parent=1 // pred_fallthru
      _
    // Predicated region
    $region10: #{tpu_custom_call.1} parent=1 // pred_check
      _
    $region11: #{tpu_custom_call.1} parent=1 // pred_check_branch
      %41 = sbr.rel (0) target = $region13
    $region12: #{tpu_custom_call.1} parent=1 // pred_region
      _
    $region13: #{tpu_custom_call.1} parent=1 // pred_fallthru
      _
    // Predicated region
    $region14: #{tpu_custom_call.1} parent=1 // pred_check
      _
    $region15: #{tpu_custom_call.1} parent=1 // pred_check_branch
      %43 = sbr.rel (0) target = $region17
    $region16: #{tpu_custom_call.1} parent=1 // pred_region
      %s45 = ssub.s32 512, 512
      %46 = vsyncadd [#allocation6], %s45
      %s47 = sshll.u32 [#allocation7], 4
      %s48 = int_to_ptr.vmem [resolvable:$true] %s47
      %53 = dma.hbm_to_vmem [thread:$0]  %s3, 512, %s48, [#allocation6], 64, 64, 4
    $region17: #{tpu_custom_call.1} parent=1 // pred_fallthru
      _
    // Predicated region
    $region18: #{tpu_custom_call.1} parent=1 // pred_check
      _
    $region19: #{tpu_custom_call.1} parent=1 // pred_check_branch
      %55 = sbr.rel (0) target = $region21
    $region20: #{tpu_custom_call.1} parent=1 // pred_region
      _
    $region21: #{tpu_custom_call.1} parent=1 // pred_fallthru
      _
    // Predicated region
    $region22: #{tpu_custom_call.1} parent=1 // pred_check
      _
    $region23: #{tpu_custom_call.1} parent=1 // pred_check_branch
      %57 = sbr.rel (0) target = $region25
    $region24: #{tpu_custom_call.1} parent=1 // pred_region
      %s59 = ssub.s32 512, 512
      %60 = vsyncadd [#allocation9], %s59
      %s61 = sshll.u32 [#allocation8], 4
      %s62 = int_to_ptr.vmem [resolvable:$true] %s61
      %67 = dma.hbm_to_vmem [thread:$0]  %s5, 512, %s62, [#allocation9], 64, 64, 4
    $region25: #{tpu_custom_call.1} parent=1 // pred_fallthru
      _
    // Predicated region
    $region26: #{tpu_custom_call.1} parent=1 // pred_check
      _
    $region27: #{tpu_custom_call.1} parent=1 // pred_check_branch
      %69 = sbr.rel (0) target = $region29
    $region28: #{tpu_custom_call.1} parent=1 // pred_region
      _
    $region29: #{tpu_custom_call.1} parent=1 // pred_fallthru
      _
    // Predicated region
    $region30: #{tpu_custom_call.1} parent=1 // pred_check
      _
    $region31: #{tpu_custom_call.1} parent=1 // pred_check_branch
      %71 = sbr.rel (0) target = $region33
    $region32: #{tpu_custom_call.1} parent=1 // pred_region
      %72 = dma.done [#allocation3], 256
    $region33: #{tpu_custom_call.1} parent=1 // pred_fallthru
      _
    // Predicated region
    $region34: #{tpu_custom_call.1} parent=1 // pred_check
      _
    $region35: #{tpu_custom_call.1} parent=1 // pred_check_branch
      %74 = sbr.rel (0) target = $region37
    $region36: #{tpu_custom_call.1} parent=1 // pred_region
      %75 = dma.done [#allocation6], 256
    $region37: #{tpu_custom_call.1} parent=1 // pred_fallthru
      _
    // Predicated region
    $region38: #{tpu_custom_call.1} parent=1 // pred_check
      _
    $region39: #{tpu_custom_call.1} parent=1 // pred_check_branch
      %77 = sbr.rel (0) target = $region41
    $region40: #{tpu_custom_call.1} parent=1 // pred_region
      %78 = dma.done [#allocation6], 512
    $region41: #{tpu_custom_call.1} parent=1 // pred_fallthru
      _
    // Predicated region
    $region42: #{tpu_custom_call.1} parent=1 // pred_check
      _
    $region43: #{tpu_custom_call.1} parent=1 // pred_check_branch
      %80 = sbr.rel (0) target = $region45
    $region44: #{tpu_custom_call.1} parent=1 // pred_region
      %81 = dma.done [#allocation9], 512
    $region45: #{tpu_custom_call.1} parent=1 // pred_fallthru
      _
    %v83 = vld [vmem:[#allocation2] sm:$0xff]
    %v84 = vld [vmem:[#allocation2 + $0x8] sm:$0xff]
    %v85 = vld [vmem:[#allocation5] sm:$0xf]
    %v86 = vld [vmem:[#allocation5 + $0x4] sm:$0xf]
    %v87 = vld [vmem:[#allocation5 + $0x8] sm:$0xf]
    %v88 = vld [vmem:[#allocation5 + $0xc] sm:$0xf]
    %v89 = vld [vmem:[%s2] sm:$0x1]
    %v90 = vpack.c.bf16 %v84, %v83
    %v92 = vlaneseq
    %v93 = vshrl.u32 %v92, 7
    %v94 = vsub.s32 0, %v93
    %v95 = vrot.slane %v89, %v94
    %v101 = vunpack.c.l.b16 %v85
    %v102 = vunpack.c.l.b16 %v86
    %v103 = vunpack.c.l.b16 %v87
    %v104 = vunpack.c.l.b16 %v88
    %v105 = vpack.c.b16 %v102, %v101
    %v106 = vpack.c.b16 %v104, %v103
    %vm109 = vcmask 261120
    %v111 = vsel %vm109, %v90, 0
    %113 = vmatprep.subr.bf16.mxu0 0
    %114 = vmatpush1.bf16.msra.mxu0 %v105
    %115 = vmatprep.subr.bf16.mxu0 0
    %116 = vmatpush1.bf16.msra.mxu0 %v106
    %117 = vmatprep.subr.bf16.mxu0 0
    %118 = vmatpush1.bf16.msra.mxu0 0
    %119 = vmatprep.subr.bf16.mxu0 0
    %120 = vmatpush1.bf16.msra.mxu0 0
    %121 = vmatprep.subr.bf16.mxu0 0
    %122 = vmatpush1.bf16.msra.mxu0 0
    %123 = vmatprep.subr.bf16.mxu0 0
    %124 = vmatpush1.bf16.msra.mxu0 0
    %125 = vmatprep.subr.bf16.mxu0 0
    %126 = vmatpush1.bf16.msra.mxu0 0
    %127 = vmatprep.subr.bf16.mxu0 0
    %128 = vmatpush1.bf16.msra.mxu0 0
    %129 = vmatprep.subr.bf16.mxu0 0
    %130 = vmatpush1.bf16.msra.mxu0 0
    %131 = vmatprep.subr.bf16.mxu0 0
    %132 = vmatpush1.bf16.msra.mxu0 0
    %133 = vmatprep.subr.bf16.mxu0 0
    %134 = vmatpush1.bf16.msra.mxu0 0
    %135 = vmatprep.subr.bf16.mxu0 0
    %136 = vmatpush1.bf16.msra.mxu0 0
    %137 = vmatprep.subr.bf16.mxu0 0
    %138 = vmatpush1.bf16.msra.mxu0 0
    %139 = vmatprep.subr.bf16.mxu0 0
    %140 = vmatpush1.bf16.msra.mxu0 0
    %141 = vmatprep.subr.bf16.mxu0 0
    %142 = vmatpush1.bf16.msra.mxu0 0
    %143 = vmatprep.subr.bf16.mxu0 0
    %144 = vmatpush1.bf16.msra.mxu0 0
    %145 = vmatprep.mubr.bf16.mxu0 0
    %146 = vmatmul.mubr.bf16.gmra.mrb[0].mxu0 %v111
    %v147 = vpop.f32.mrb[0].mxu0
    %v148 = vadd.f32 %v95, %v147
    %v149 = vpop.f32.mrb[0].mxu0
    %v150 = vpop.f32.mrb[0].mxu0
    %v151 = vadd.f32 %v95, %v150
    %v152 = vpop.f32.mrb[0].mxu0
    %153 = vdwg.mxu0
    %v154 = vmax.f32 %v148, 0.0
    %v155 = vmax.f32 %v151, 0.0
    %v156 = vld [vmem:[#allocation7] sm:$0xf]
    %v157 = vld [vmem:[#allocation7 + $0x4] sm:$0xf]
    %v158 = vld [vmem:[#allocation7 + $0x8] sm:$0xf]
    %v159 = vld [vmem:[#allocation7 + $0xc] sm:$0xf]
    %v160 = vld [vmem:[#allocation7 + $0x10] sm:$0xf]
    %v161 = vld [vmem:[#allocation7 + $0x14] sm:$0xf]
    %v162 = vld [vmem:[#allocation7 + $0x18] sm:$0xf]
    %v163 = vld [vmem:[#allocation7 + $0x1c] sm:$0xf]
    %v164 = vld [vmem:[%s4] sm:$0x1]
    %v165 = vpack.c.bf16 %v155, %v154
    %v167 = vlaneseq
    %v168 = vshrl.u32 %v167, 7
    %v169 = vsub.s32 0, %v168
    %v170 = vrot.slane %v164, %v169
    %v180 = vunpack.c.l.b16 %v156
    %v181 = vunpack.c.l.b16 %v157
    %v182 = vunpack.c.l.b16 %v158
    %v183 = vunpack.c.l.b16 %v159
    %v184 = vunpack.c.l.b16 %v160
    %v185 = vunpack.c.l.b16 %v161
    %v186 = vunpack.c.l.b16 %v162
    %v187 = vunpack.c.l.b16 %v163
    %v188 = vpack.c.b16 %v181, %v180
    %v189 = vpack.c.b16 %v183, %v182
    %v190 = vpack.c.b16 %v185, %v184
    %v191 = vpack.c.b16 %v187, %v186
    %vm196 = vcmask 523264
    %v198 = vsel %vm196, %v165, 0
    %200 = vmatprep.subr.bf16.mxu0 0
    %201 = vmatpush1.bf16.msra.mxu0 %v188
    %202 = vmatprep.subr.bf16.mxu0 0
    %203 = vmatpush1.bf16.msra.mxu0 %v189
    %204 = vmatprep.subr.bf16.mxu0 0
    %205 = vmatpush1.bf16.msra.mxu0 %v190
    %206 = vmatprep.subr.bf16.mxu0 0
    %207 = vmatpush1.bf16.msra.mxu0 %v191
    %208 = vmatprep.subr.bf16.mxu0 0
    %209 = vmatpush1.bf16.msra.mxu0 0
    %210 = vmatprep.subr.bf16.mxu0 0
    %211 = vmatpush1.bf16.msra.mxu0 0
    %212 = vmatprep.subr.bf16.mxu0 0
    %213 = vmatpush1.bf16.msra.mxu0 0
    %214 = vmatprep.subr.bf16.mxu0 0
    %215 = vmatpush1.bf16.msra.mxu0 0
    %216 = vmatprep.subr.bf16.mxu0 0
    %217 = vmatpush1.bf16.msra.mxu0 0
    %218 = vmatprep.subr.bf16.mxu0 0
    %219 = vmatpush1.bf16.msra.mxu0 0
    %220 = vmatprep.subr.bf16.mxu0 0
    %221 = vmatpush1.bf16.msra.mxu0 0
    %222 = vmatprep.subr.bf16.mxu0 0
    %223 = vmatpush1.bf16.msra.mxu0 0
    %224 = vmatprep.subr.bf16.mxu0 0
    %225 = vmatpush1.bf16.msra.mxu0 0
    %226 = vmatprep.subr.bf16.mxu0 0
    %227 = vmatpush1.bf16.msra.mxu0 0
    %228 = vmatprep.subr.bf16.mxu0 0
    %229 = vmatpush1.bf16.msra.mxu0 0
    %230 = vmatprep.subr.bf16.mxu0 0
    %231 = vmatpush1.bf16.msra.mxu0 0
    %232 = vmatprep.mubr.bf16.mxu0 0
    %233 = vmatmul.mubr.bf16.gmra.mrb[0].mxu0 %v198
    %v234 = vpop.f32.mrb[0].mxu0
    %v235 = vadd.f32 %v170, %v234
    %v236 = vpop.f32.mrb[0].mxu0
    %v237 = vpop.f32.mrb[0].mxu0
    %v238 = vadd.f32 %v170, %v237
    %v239 = vpop.f32.mrb[0].mxu0
    %240 = vdwg.mxu0
    %v241 = vmax.f32 %v235, 0.0
    %v242 = vmax.f32 %v238, 0.0
    %v243 = vld [vmem:[#allocation8] sm:$0xf]
    %v244 = vld [vmem:[#allocation8 + $0x4] sm:$0xf]
    %v245 = vld [vmem:[#allocation8 + $0x8] sm:$0xf]
    %v246 = vld [vmem:[#allocation8 + $0xc] sm:$0xf]
    %v247 = vld [vmem:[#allocation8 + $0x10] sm:$0xf]
    %v248 = vld [vmem:[#allocation8 + $0x14] sm:$0xf]
    %v249 = vld [vmem:[#allocation8 + $0x18] sm:$0xf]
    %v250 = vld [vmem:[#allocation8 + $0x1c] sm:$0xf]
    %v251 = vld [vmem:[%s6] sm:$0x1]
    %v252 = vpack.c.bf16 %v242, %v241
    %v254 = vlaneseq
    %v255 = vshrl.u32 %v254, 7
    %v256 = vsub.s32 0, %v255
    %v257 = vrot.slane %v251, %v256
    %v267 = vunpack.c.l.b16 %v243
    %v268 = vunpack.c.l.b16 %v244
    %v269 = vunpack.c.l.b16 %v245
    %v270 = vunpack.c.l.b16 %v246
    %v271 = vunpack.c.l.b16 %v247
    %v272 = vunpack.c.l.b16 %v248
    %v273 = vunpack.c.l.b16 %v249
    %v274 = vunpack.c.l.b16 %v250
    %v275 = vpack.c.b16 %v268, %v267
    %v276 = vpack.c.b16 %v270, %v269
    %v277 = vpack.c.b16 %v272, %v271
    %v278 = vpack.c.b16 %v274, %v273
    %v284 = vsel %vm196, %v252, 0
    %286 = vmatprep.subr.bf16.mxu0 0
    %287 = vmatpush1.bf16.msra.mxu0 %v275
    %288 = vmatprep.subr.bf16.mxu0 0
    %289 = vmatpush1.bf16.msra.mxu0 %v276
    %290 = vmatprep.subr.bf16.mxu0 0
    %291 = vmatpush1.bf16.msra.mxu0 %v277
    %292 = vmatprep.subr.bf16.mxu0 0
    %293 = vmatpush1.bf16.msra.mxu0 %v278
    %294 = vmatprep.subr.bf16.mxu0 0
    %295 = vmatpush1.bf16.msra.mxu0 0
    %296 = vmatprep.subr.bf16.mxu0 0
    %297 = vmatpush1.bf16.msra.mxu0 0
    %298 = vmatprep.subr.bf16.mxu0 0
    %299 = vmatpush1.bf16.msra.mxu0 0
    %300 = vmatprep.subr.bf16.mxu0 0
    %301 = vmatpush1.bf16.msra.mxu0 0
    %302 = vmatprep.subr.bf16.mxu0 0
    %303 = vmatpush1.bf16.msra.mxu0 0
    %304 = vmatprep.subr.bf16.mxu0 0
    %305 = vmatpush1.bf16.msra.mxu0 0
    %306 = vmatprep.subr.bf16.mxu0 0
    %307 = vmatpush1.bf16.msra.mxu0 0
    %308 = vmatprep.subr.bf16.mxu0 0
    %309 = vmatpush1.bf16.msra.mxu0 0
    %310 = vmatprep.subr.bf16.mxu0 0
    %311 = vmatpush1.bf16.msra.mxu0 0
    %312 = vmatprep.subr.bf16.mxu0 0
    %313 = vmatpush1.bf16.msra.mxu0 0
    %314 = vmatprep.subr.bf16.mxu0 0
    %315 = vmatpush1.bf16.msra.mxu0 0
    %316 = vmatprep.subr.bf16.mxu0 0
    %317 = vmatpush1.bf16.msra.mxu0 0
    %318 = vmatprep.mubr.bf16.mxu0 0
    %319 = vmatmul.mubr.bf16.gmra.mrb[0].mxu0 %v284
    %v320 = vpop.f32.mrb[0].mxu0
    %v321 = vadd.f32 %v257, %v320
    %v322 = vpop.f32.mrb[0].mxu0
    %v323 = vpop.f32.mrb[0].mxu0
    %v324 = vadd.f32 %v257, %v323
    %v325 = vpop.f32.mrb[0].mxu0
    %326 = vdwg.mxu0
    %327 = vst [vmem:[#allocation10] sm:$0xff] %v321
    %328 = vst [vmem:[#allocation10 + $0x8] sm:$0xff] %v324
    // Predicated region
    $region46: #{tpu_custom_call.1} parent=1 // pred_check
      _
    $region47: #{tpu_custom_call.1} parent=1 // pred_check_branch
      %330 = sbr.rel (0) target = $region49
    $region48: #{tpu_custom_call.1} parent=1 // pred_region
      %s332 = ssub.s32 256, 256
      %333 = vsyncadd [#allocation4], %s332
      %s334 = sshll.u32 [#allocation10], 4
      %s335 = int_to_ptr.vmem [resolvable:$true] %s334
      %340 = dma.vmem_to_hbm [thread:$0]  %s335, 256, %s7, [#allocation4], 128, 128, 8
    $region49: #{tpu_custom_call.1} parent=1 // pred_fallthru
      _
    // Predicated region
    $region50: #{tpu_custom_call.1} parent=1 // pred_check
      _
    $region51: #{tpu_custom_call.1} parent=1 // pred_check_branch
      %342 = sbr.rel (0) target = $region53
    $region52: #{tpu_custom_call.1} parent=1 // pred_region
      %343 = dma.done [#allocation4], 256
    $region53: #{tpu_custom_call.1} parent=1 // pred_fallthru
      _
    %344 = vsyncpa [#allocation3], 1
    %345 = vsyncpa [#allocation6], 1
    %346 = vsyncpa [#allocation9], 1
    %347 = vsyncpa [#allocation4], 1

// kernel: tpu_custom_call.1
$region0: #{tpu_custom_call.1}
  #allocation0 [shape = 'u32[]', space=smem, size = 0x4, offset = 0x4, fixed_abs, tag = 'smem constant byte address 0x4 - core index']
  #allocation1 [shape = 'u32[144,128]{1,0:T(1,128)}', space=vmem, size = 0x12000, scoped, tag = 'internal scratch']
  %s0 = inlined_call_operand.hbm [shape: f32[16,32], index: 0, kind: input, shape index: {}]
  %s1 = inlined_call_operand.hbm [shape: bf16[32,64], index: 1, kind: input, shape index: {}]
  %s2 = inlined_call_operand.vmem [shape: f32[1,64], index: 2, kind: input, shape index: {}]
  %s3 = inlined_call_operand.hbm [shape: bf16[64,64], index: 3, kind: input, shape index: {}]
  %s4 = inlined_call_operand.vmem [shape: f32[1,64], index: 4, kind: input, shape index: {}]
  %s5 = inlined_call_operand.hbm [shape: bf16[64,128], index: 5, kind: input, shape index: {}]
  %s6 = inlined_call_operand.vmem [shape: f32[1,128], index: 6, kind: input, shape index: {}]
  %s7 = inlined_call_operand.hbm [shape: f32[16,128], index: 7, kind: output, shape index: {}]
  %s8 = sld [smem:[#allocation0]]
  $region54: #{tpu_custom_call.1} parent=0
    _
  %s10 = ssub.s32 1, %s8
  %s11 = scalar_select 0, %s10, %s8
  $region1: #{tpu_custom_call.1} parent=0
    #allocation2 [shape = 'u8[8192]{0}', space=vmem, size = 0x2000, scoped, tag = 'input window, operand 0, single buffered']
    #allocation3 [shape = 's32[1]{0}', space=sflag, size = 0x4, scoped, tag = 'scoped memory for tpu_custom_call.1']
    #allocation4 [shape = 's32[1]{0}', space=sflag, size = 0x4, scoped, tag = 'scoped memory for tpu_custom_call.1']
    #allocation5 [shape = 'u8[8192]{0}', space=vmem, size = 0x2000, scoped, tag = 'input window, operand 1, single buffered']
    #allocation6 [shape = 's32[1]{0}', space=sflag, size = 0x4, scoped, tag = 'scoped memory for tpu_custom_call.1']
    #allocation7 [shape = 'u8[16384]{0}', space=vmem, size = 0x4000, scoped, tag = 'input window, operand 3, single buffered']
    #allocation8 [shape = 'u8[16384]{0}', space=vmem, size = 0x4000, scoped, tag = 'input window, operand 5, single buffered']
    #allocation9 [shape = 's32[1]{0}', space=sflag, size = 0x4, scoped, tag = 'scoped memory for tpu_custom_call.1']
    #allocation10 [shape = 'u8[8192]{0}', space=vmem, size = 0x2000, scoped, tag = 'output window, operand 0, single buffered']
    %12 = vsyncpa [#allocation3], 0
    %13 = vsyncpa [#allocation6], 0
    %14 = vsyncpa [#allocation9], 0
    %15 = vsyncpa [#allocation4], 0
    // Predicated region
    $region2: #{tpu_custom_call.1} parent=1 // pred_check
      _
    $region3: #{tpu_custom_call.1} parent=1 // pred_check_branch
      %17 = sbr.rel (0) target = $region5
    $region4: #{tpu_custom_call.1} parent=1 // pred_region
      %s19 = ssub.s32 256, 256
      %20 = vsyncadd [#allocation3], %s19
      %s21 = sshll.u32 [#allocation2], 4
      %s22 = int_to_ptr.vmem [resolvable:$true] %s21
      %27 = dma.hbm_to_vmem [thread:$0]  %s0, 256, %s22, [#allocation3], 128, 128, 8
    $region5: #{tpu_custom_call.1} parent=1 // pred_fallthru
      _
    // Predicated region
    $region6: #{tpu_custom_call.1} parent=1 // pred_check
      _
    $region7: #{tpu_custom_call.1} parent=1 // pred_check_branch
      %29 = sbr.rel (0) target = $region9
    $region8: #{tpu_custom_call.1} parent=1 // pred_region
      %s31 = ssub.s32 256, 256
      %32 = vsyncadd [#allocation6], %s31
      %s33 = sshll.u32 [#allocation5], 4
      %s34 = int_to_ptr.vmem [resolvable:$true] %s33
      %39 = dma.hbm_to_vmem [thread:$0]  %s1, 256, %s34, [#allocation6], 64, 64, 4
    $region9: #{tpu_custom_call.1} parent=1 // pred_fallthru
      _
    // Predicated region
    $region10: #{tpu_custom_call.1} parent=1 // pred_check
      _
    $region11: #{tpu_custom_call.1} parent=1 // pred_check_branch
      %41 = sbr.rel (0) target = $region13
    $region12: #{tpu_custom_call.1} parent=1 // pred_region
      _
    $region13: #{tpu_custom_call.1} parent=1 // pred_fallthru
      _
    // Predicated region
    $region14: #{tpu_custom_call.1} parent=1 // pred_check
      _
    $region15: #{tpu_custom_call.1} parent=1 // pred_check_branch
      %43 = sbr.rel (0) target = $region17
    $region16: #{tpu_custom_call.1} parent=1 // pred_region
      %s45 = ssub.s32 512, 512
      %46 = vsyncadd [#allocation6], %s45
      %s47 = sshll.u32 [#allocation7], 4
      %s48 = int_to_ptr.vmem [resolvable:$true] %s47
      %53 = dma.hbm_to_vmem [thread:$0]  %s3, 512, %s48, [#allocation6], 64, 64, 4
    $region17: #{tpu_custom_call.1} parent=1 // pred_fallthru
      _
    // Predicated region
    $region18: #{tpu_custom_call.1} parent=1 // pred_check
      _
    $region19: #{tpu_custom_call.1} parent=1 // pred_check_branch
      %55 = sbr.rel (0) target = $region21
    $region20: #{tpu_custom_call.1} parent=1 // pred_region
      _
    $region21: #{tpu_custom_call.1} parent=1 // pred_fallthru
      _
    // Predicated region
    $region22: #{tpu_custom_call.1} parent=1 // pred_check
      _
    $region23: #{tpu_custom_call.1} parent=1 // pred_check_branch
      %57 = sbr.rel (0) target = $region25
    $region24: #{tpu_custom_call.1} parent=1 // pred_region
      %s59 = ssub.s32 512, 512
      %60 = vsyncadd [#allocation9], %s59
      %s61 = sshll.u32 [#allocation8], 4
      %s62 = int_to_ptr.vmem [resolvable:$true] %s61
      %67 = dma.hbm_to_vmem [thread:$0]  %s5, 512, %s62, [#allocation9], 64, 64, 4
    $region25: #{tpu_custom_call.1} parent=1 // pred_fallthru
      _
    // Predicated region
    $region26: #{tpu_custom_call.1} parent=1 // pred_check
      _
    $region27: #{tpu_custom_call.1} parent=1 // pred_check_branch
      %69 = sbr.rel (0) target = $region29
    $region28: #{tpu_custom_call.1} parent=1 // pred_region
      _
    $region29: #{tpu_custom_call.1} parent=1 // pred_fallthru
      _
    // Predicated region
    $region30: #{tpu_custom_call.1} parent=1 // pred_check
      _
    $region31: #{tpu_custom_call.1} parent=1 // pred_check_branch
      %71 = sbr.rel (0) target = $region33
    $region32: #{tpu_custom_call.1} parent=1 // pred_region
      %72 = dma.done [#allocation3], 256
    $region33: #{tpu_custom_call.1} parent=1 // pred_fallthru
      _
    // Predicated region
    $region34: #{tpu_custom_call.1} parent=1 // pred_check
      _
    $region35: #{tpu_custom_call.1} parent=1 // pred_check_branch
      %74 = sbr.rel (0) target = $region37
    $region36: #{tpu_custom_call.1} parent=1 // pred_region
      %75 = dma.done [#allocation6], 256
    $region37: #{tpu_custom_call.1} parent=1 // pred_fallthru
      _
    // Predicated region
    $region38: #{tpu_custom_call.1} parent=1 // pred_check
      _
    $region39: #{tpu_custom_call.1} parent=1 // pred_check_branch
      %77 = sbr.rel (0) target = $region41
    $region40: #{tpu_custom_call.1} parent=1 // pred_region
      %78 = dma.done [#allocation6], 512
    $region41: #{tpu_custom_call.1} parent=1 // pred_fallthru
      _
    // Predicated region
    $region42: #{tpu_custom_call.1} parent=1 // pred_check
      _
    $region43: #{tpu_custom_call.1} parent=1 // pred_check_branch
      %80 = sbr.rel (0) target = $region45
    $region44: #{tpu_custom_call.1} parent=1 // pred_region
      %81 = dma.done [#allocation9], 512
    $region45: #{tpu_custom_call.1} parent=1 // pred_fallthru
      _
    %v83 = vld [vmem:[#allocation2] sm:$0xff]
    %v84 = vld [vmem:[#allocation2 + $0x8] sm:$0xff]
    %v85 = vld [vmem:[#allocation5] sm:$0xf]
    %v86 = vld [vmem:[#allocation5 + $0x4] sm:$0xf]
    %v87 = vld [vmem:[#allocation5 + $0x8] sm:$0xf]
    %v88 = vld [vmem:[#allocation5 + $0xc] sm:$0xf]
    %v89 = vld [vmem:[%s2] sm:$0x1]
    %v90 = vpack.c.bf16 %v84, %v83
    %v92 = vlaneseq
    %v93 = vshrl.u32 %v92, 7
    %v94 = vsub.s32 0, %v93
    %v95 = vrot.slane %v89, %v94
    %v101 = vunpack.c.l.b16 %v85
    %v102 = vunpack.c.l.b16 %v86
    %v103 = vunpack.c.l.b16 %v87
    %v104 = vunpack.c.l.b16 %v88
    %v105 = vpack.c.b16 %v102, %v101
    %v106 = vpack.c.b16 %v104, %v103
    %vm109 = vcmask 261120
    %v111 = vsel %vm109, %v90, 0
    %113 = vmatprep.subr.bf16.mxu0 0
    %114 = vmatpush1.bf16.msra.mxu0 %v105
    %115 = vmatprep.subr.bf16.mxu0 0
    %116 = vmatpush1.bf16.msra.mxu0 %v106
    %117 = vmatprep.subr.bf16.mxu0 0
    %118 = vmatpush1.bf16.msra.mxu0 0
    %119 = vmatprep.subr.bf16.mxu0 0
    %120 = vmatpush1.bf16.msra.mxu0 0
    %121 = vmatprep.subr.bf16.mxu0 0
    %122 = vmatpush1.bf16.msra.mxu0 0
    %123 = vmatprep.subr.bf16.mxu0 0
    %124 = vmatpush1.bf16.msra.mxu0 0
    %125 = vmatprep.subr.bf16.mxu0 0
    %126 = vmatpush1.bf16.msra.mxu0 0
    %127 = vmatprep.subr.bf16.mxu0 0
    %128 = vmatpush1.bf16.msra.mxu0 0
    %129 = vmatprep.subr.bf16.mxu0 0
    %130 = vmatpush1.bf16.msra.mxu0 0
    %131 = vmatprep.subr.bf16.mxu0 0
    %132 = vmatpush1.bf16.msra.mxu0 0
    %133 = vmatprep.subr.bf16.mxu0 0
    %134 = vmatpush1.bf16.msra.mxu0 0
    %135 = vmatprep.subr.bf16.mxu0 0
    %136 = vmatpush1.bf16.msra.mxu0 0
    %137 = vmatprep.subr.bf16.mxu0 0
    %138 = vmatpush1.bf16.msra.mxu0 0
    %139 = vmatprep.subr.bf16.mxu0 0
    %140 = vmatpush1.bf16.msra.mxu0 0
    %141 = vmatprep.subr.bf16.mxu0 0
    %142 = vmatpush1.bf16.msra.mxu0 0
    %143 = vmatprep.subr.bf16.mxu0 0
    %144 = vmatpush1.bf16.msra.mxu0 0
    %145 = vmatprep.mubr.bf16.mxu0 0
    %146 = vmatmul.mubr.bf16.gmra.mrb[0].mxu0 %v111
    %v147 = vpop.f32.mrb[0].mxu0
    %v148 = vadd.f32 %v95, %v147
    %v149 = vpop.f32.mrb[0].mxu0
    %v150 = vpop.f32.mrb[0].mxu0
    %v151 = vadd.f32 %v95, %v150
    %v152 = vpop.f32.mrb[0].mxu0
    %153 = vdwg.mxu0
    %v154 = vmax.f32 %v148, 0.0
    %v155 = vmax.f32 %v151, 0.0
    %v156 = vld [vmem:[#allocation7] sm:$0xf]
    %v157 = vld [vmem:[#allocation7 + $0x4] sm:$0xf]
    %v158 = vld [vmem:[#allocation7 + $0x8] sm:$0xf]
    %v159 = vld [vmem:[#allocation7 + $0xc] sm:$0xf]
    %v160 = vld [vmem:[#allocation7 + $0x10] sm:$0xf]
    %v161 = vld [vmem:[#allocation7 + $0x14] sm:$0xf]
    %v162 = vld [vmem:[#allocation7 + $0x18] sm:$0xf]
    %v163 = vld [vmem:[#allocation7 + $0x1c] sm:$0xf]
    %v164 = vld [vmem:[%s4] sm:$0x1]
    %v165 = vpack.c.bf16 %v155, %v154
    %v167 = vlaneseq
    %v168 = vshrl.u32 %v167, 7
    %v169 = vsub.s32 0, %v168
    %v170 = vrot.slane %v164, %v169
    %v180 = vunpack.c.l.b16 %v156
    %v181 = vunpack.c.l.b16 %v157
    %v182 = vunpack.c.l.b16 %v158
    %v183 = vunpack.c.l.b16 %v159
    %v184 = vunpack.c.l.b16 %v160
    %v185 = vunpack.c.l.b16 %v161
    %v186 = vunpack.c.l.b16 %v162
    %v187 = vunpack.c.l.b16 %v163
    %v188 = vpack.c.b16 %v181, %v180
    %v189 = vpack.c.b16 %v183, %v182
    %v190 = vpack.c.b16 %v185, %v184
    %v191 = vpack.c.b16 %v187, %v186
    %vm196 = vcmask 523264
    %v198 = vsel %vm196, %v165, 0
    %200 = vmatprep.subr.bf16.mxu0 0
    %201 = vmatpush1.bf16.msra.mxu0 %v188
    %202 = vmatprep.subr.bf16.mxu0 0
    %203 = vmatpush1.bf16.msra.mxu0 %v189
    %204 = vmatprep.subr.bf16.mxu0 0
    %205 = vmatpush1.bf16.msra.mxu0 %v190
    %206 = vmatprep.subr.bf16.mxu0 0
    %207 = vmatpush1.bf16.msra.mxu0 %v191
    %208 = vmatprep.subr.bf16.mxu0 0
    %209 = vmatpush1.bf16.msra.mxu0 0
    %210 = vmatprep.subr.bf16.mxu0 0
    %211 = vmatpush1.bf16.msra.mxu0 0
    %212 = vmatprep.subr.bf16.mxu0 0
    %213 = vmatpush1.bf16.msra.mxu0 0
    %214 = vmatprep.subr.bf16.mxu0 0
    %215 = vmatpush1.bf16.msra.mxu0 0
    %216 = vmatprep.subr.bf16.mxu0 0
    %217 = vmatpush1.bf16.msra.mxu0 0
    %218 = vmatprep.subr.bf16.mxu0 0
    %219 = vmatpush1.bf16.msra.mxu0 0
    %220 = vmatprep.subr.bf16.mxu0 0
    %221 = vmatpush1.bf16.msra.mxu0 0
    %222 = vmatprep.subr.bf16.mxu0 0
    %223 = vmatpush1.bf16.msra.mxu0 0
    %224 = vmatprep.subr.bf16.mxu0 0
    %225 = vmatpush1.bf16.msra.mxu0 0
    %226 = vmatprep.subr.bf16.mxu0 0
    %227 = vmatpush1.bf16.msra.mxu0 0
    %228 = vmatprep.subr.bf16.mxu0 0
    %229 = vmatpush1.bf16.msra.mxu0 0
    %230 = vmatprep.subr.bf16.mxu0 0
    %231 = vmatpush1.bf16.msra.mxu0 0
    %232 = vmatprep.mubr.bf16.mxu0 0
    %233 = vmatmul.mubr.bf16.gmra.mrb[0].mxu0 %v198
    %v234 = vpop.f32.mrb[0].mxu0
    %v235 = vadd.f32 %v170, %v234
    %v236 = vpop.f32.mrb[0].mxu0
    %v237 = vpop.f32.mrb[0].mxu0
    %v238 = vadd.f32 %v170, %v237
    %v239 = vpop.f32.mrb[0].mxu0
    %240 = vdwg.mxu0
    %v241 = vmax.f32 %v235, 0.0
    %v242 = vmax.f32 %v238, 0.0
    %v243 = vld [vmem:[#allocation8] sm:$0xf]
    %v244 = vld [vmem:[#allocation8 + $0x4] sm:$0xf]
    %v245 = vld [vmem:[#allocation8 + $0x8] sm:$0xf]
    %v246 = vld [vmem:[#allocation8 + $0xc] sm:$0xf]
    %v247 = vld [vmem:[#allocation8 + $0x10] sm:$0xf]
    %v248 = vld [vmem:[#allocation8 + $0x14] sm:$0xf]
    %v249 = vld [vmem:[#allocation8 + $0x18] sm:$0xf]
    %v250 = vld [vmem:[#allocation8 + $0x1c] sm:$0xf]
    %v251 = vld [vmem:[%s6] sm:$0x1]
    %v252 = vpack.c.bf16 %v242, %v241
    %v254 = vlaneseq
    %v255 = vshrl.u32 %v254, 7
    %v256 = vsub.s32 0, %v255
    %v257 = vrot.slane %v251, %v256
    %v267 = vunpack.c.l.b16 %v243
    %v268 = vunpack.c.l.b16 %v244
    %v269 = vunpack.c.l.b16 %v245
    %v270 = vunpack.c.l.b16 %v246
    %v271 = vunpack.c.l.b16 %v247
    %v272 = vunpack.c.l.b16 %v248
    %v273 = vunpack.c.l.b16 %v249
    %v274 = vunpack.c.l.b16 %v250
    %v275 = vpack.c.b16 %v268, %v267
    %v276 = vpack.c.b16 %v270, %v269
    %v277 = vpack.c.b16 %v272, %v271
    %v278 = vpack.c.b16 %v274, %v273
    %v284 = vsel %vm196, %v252, 0
    %286 = vmatprep.subr.bf16.mxu0 0
    %287 = vmatpush1.bf16.msra.mxu0 %v275
    %288 = vmatprep.subr.bf16.mxu0 0
    %289 = vmatpush1.bf16.msra.mxu0 %v276
    %290 = vmatprep.subr.bf16.mxu0 0
    %291 = vmatpush1.bf16.msra.mxu0 %v277
    %292 = vmatprep.subr.bf16.mxu0 0
    %293 = vmatpush1.bf16.msra.mxu0 %v278
    %294 = vmatprep.subr.bf16.mxu0 0
    %295 = vmatpush1.bf16.msra.mxu0 0
    %296 = vmatprep.subr.bf16.mxu0 0
    %297 = vmatpush1.bf16.msra.mxu0 0
    %298 = vmatprep.subr.bf16.mxu0 0
    %299 = vmatpush1.bf16.msra.mxu0 0
    %300 = vmatprep.subr.bf16.mxu0 0
    %301 = vmatpush1.bf16.msra.mxu0 0
    %302 = vmatprep.subr.bf16.mxu0 0
    %303 = vmatpush1.bf16.msra.mxu0 0
    %304 = vmatprep.subr.bf16.mxu0 0
    %305 = vmatpush1.bf16.msra.mxu0 0
    %306 = vmatprep.subr.bf16.mxu0 0
    %307 = vmatpush1.bf16.msra.mxu0 0
    %308 = vmatprep.subr.bf16.mxu0 0
    %309 = vmatpush1.bf16.msra.mxu0 0
    %310 = vmatprep.subr.bf16.mxu0 0
    %311 = vmatpush1.bf16.msra.mxu0 0
    %312 = vmatprep.subr.bf16.mxu0 0
    %313 = vmatpush1.bf16.msra.mxu0 0
    %314 = vmatprep.subr.bf16.mxu0 0
    %315 = vmatpush1.bf16.msra.mxu0 0
    %316 = vmatprep.subr.bf16.mxu0 0
    %317 = vmatpush1.bf16.msra.mxu0 0
    %318 = vmatprep.mubr.bf16.mxu0 0
    %319 = vmatmul.mubr.bf16.gmra.mrb[0].mxu0 %v284
    %v320 = vpop.f32.mrb[0].mxu0
    %v321 = vadd.f32 %v257, %v320
    %v322 = vpop.f32.mrb[0].mxu0
    %v323 = vpop.f32.mrb[0].mxu0
    %v324 = vadd.f32 %v257, %v323
    %v325 = vpop.f32.mrb[0].mxu0
    %326 = vdwg.mxu0
    %327 = vst [vmem:[#allocation10] sm:$0xff] %v321
    %328 = vst [vmem:[#allocation10 + $0x8] sm:$0xff] %v324
    // Predicated region
    $region46: #{tpu_custom_call.1} parent=1 // pred_check
      _
    $region47: #{tpu_custom_call.1} parent=1 // pred_check_branch
      %330 = sbr.rel (0) target = $region49
    $region48: #{tpu_custom_call.1} parent=1 // pred_region
      %s332 = ssub.s32 256, 256
      %333 = vsyncadd [#allocation4], %s332
      %s334 = sshll.u32 [#allocation10], 4
      %s335 = int_to_ptr.vmem [resolvable:$true] %s334
      %340 = dma.vmem_to_hbm [thread:$0]  %s335, 256, %s7, [#allocation4], 128, 128, 8
    $region49: #{tpu_custom_call.1} parent=1 // pred_fallthru
      _
    // Predicated region
    $region50: #{tpu_custom_call.1} parent=1 // pred_check
      _
    $region51: #{tpu_custom_call.1} parent=1 // pred_check_branch
      %342 = sbr.rel (0) target = $region53
    $region52: #{tpu_custom_call.1} parent=1 // pred_region
      %343 = dma.done [#allocation4], 256
    $region53: #{tpu_custom_call.1} parent=1 // pred_fallthru
      _
    %344 = vsyncpa [#allocation3], 1
    %345 = vsyncpa [#allocation6], 1
    %346 = vsyncpa [#allocation9], 1
    %347 = vsyncpa [#allocation4], 1

</llo_original>
